<compile_context>
chip_gen: v5e
topology: v5e:2x2
jax: 0.10.0
libtpu: 0.0.40
codegen_flags: <defaults>
</compile_context>

<pallas_src>
import functools
import warnings

import jax
import jax.numpy as jnp
from jax.experimental import pallas as pl
from jax.experimental.pallas import tpu as pltpu


def _nonleaky_kernel(x_ref, mem_ref, spikes_ref, new_mem_ref, *,
                     threshold: float, reset_zero: bool):
    mem = mem_ref[...]
    x = x_ref[...]
    # Heaviside surrogate forward: strict > on (mem - threshold).
    # TODO(synk): some surrogate spike_fns use >= exactly at mem == threshold;
    # match the project's actual spike_fn if it differs at that point.
    spikes = (mem - threshold > 0.0).astype(mem.dtype)
    spikes_ref[...] = spikes.astype(spikes_ref.dtype)
    if reset_zero:
        new_mem_ref[...] = (mem + x) * (1.0 - spikes)
    else:
        new_mem_ref[...] = mem + x - spikes * threshold


def _round_up(v: int, m: int) -> int:
    return ((v + m - 1) // m) * m


@functools.lru_cache(maxsize=None)
def _chip_config():
    """Returns (per-stream tile bytes, vmem_limit_bytes, #TCs sharing the grid)."""
    kind = ""
    try:
        kind = jax.devices()[0].device_kind.lower()
    except Exception:
        pass
    if "v7" in kind:
        # 2 TensorCores/chip, only 64 MiB physical VMEM (32 MiB default scoped).
        return (3 << 20, 40 << 20, 2)
    if "v6" in kind:
        return (4 << 20, 48 << 20, 1)
    if "v5p" in kind or "v4" in kind:        # megacore: 2 TCs share the grid
        return (2 << 20, 32 << 20, 2)
    if "v5" in kind:                         # v5e: 16 MiB default scoped VMEM
        return (2 << 20, 32 << 20, 1)
    return (1 << 20, None, 1)                # unknown chip: stay inside defaults


def _sublane_multiple(*dtypes) -> int:
    """Second-minor block-dim multiple that is safe for all participating dtypes."""
    m = 8
    for dt in dtypes:
        m = max(m, 32 // max(1, jnp.dtype(dt).itemsize))
    return m


def _pick_lanes(n_main: int) -> int:
    """Widest lane count dividing n_main (bigger contiguous DMAs), keeping >=8 rows."""
    for lanes in (4096, 2048, 1024, 512, 256):
        if n_main % lanes == 0 and n_main // lanes >= 8:
            return lanes
    return 128


def _pick_tile_rows(rows: int, lanes: int, itemsize: int, tile_bytes: int,
                    num_tc: int, mult: int) -> int:
    if rows <= mult:
        return rows                                    # one full-extent block
    target = max(mult, tile_bytes // (itemsize * lanes))
    tile_rows = min(_round_up(target, mult), _round_up(rows, mult))
    steps = pl.cdiv(rows, tile_rows)
    if num_tc >= 2:
        if steps == 1:
            # Split so both TensorCores get work on the "parallel" axis.
            tile_rows = max(mult, _round_up(pl.cdiv(rows, 2), mult))
        elif steps % 2 == 1:
            # Best effort: even step count so no core idles on the last step.
            for want in (steps + 1, steps + 3):
                cand = max(mult, _round_up(pl.cdiv(rows, want), mult))
                if pl.cdiv(rows, cand) % 2 == 0:
                    tile_rows = cand
                    break
    return tile_rows


def _jnp_update(x, mem, threshold, reset_zero, spikes_dtype):
    """Plain-jnp fallback for tiny tails / sub-128-element inputs."""
    spikes = (mem - threshold > 0.0).astype(x.dtype)
    if reset_zero:
        new_mem = (mem + x) * (1.0 - spikes)
    else:
        new_mem = mem + x - spikes * threshold
    return spikes.astype(spikes_dtype), new_mem


def nonleaky_forward(x, mem=None, *, threshold: float = 1.0,
                     reset_zero: bool = True, spikes_dtype=None):
    """One NonLeaky neuron update. Returns (spikes, {'mem': new_mem})."""
    orig_shape = x.shape
    dtype = x.dtype
    out_spike_dtype = jnp.dtype(spikes_dtype) if spikes_dtype is not None else dtype

    if mem is None:
        # h = h or {'mem': zeros_like(x)}: with mem == 0 everything is known in
        # closed form, so skip materializing + streaming a zero array.
        spike_val = 1.0 if (0.0 - threshold) > 0.0 else 0.0
        spikes = jnp.full(orig_shape, spike_val, dtype=out_spike_dtype)
        if spike_val == 0.0:
            new_mem = x
        elif reset_zero:
            new_mem = jnp.zeros_like(x)
        else:
            new_mem = x - spike_val * threshold
        return spikes, {"mem": new_mem}

    n = x.size
    n_main = (n // 128) * 128
    if n_main == 0:
        spikes, new_mem = _jnp_update(x, mem, threshold, reset_zero, out_spike_dtype)
        return spikes, {"mem": new_mem}

    tile_bytes, vmem_limit, num_tc = _chip_config()
    lanes = _pick_lanes(n_main)
    rows = n_main // lanes
    itemsize = jnp.dtype(dtype).itemsize
    mult = _sublane_multiple(dtype, out_spike_dtype)
    tile_rows = _pick_tile_rows(rows, lanes, itemsize, tile_bytes, num_tc, mult)
    grid = (pl.cdiv(rows, tile_rows),)

    x_flat = x.reshape(-1)
    m_flat = mem.reshape(-1)
    if n_main == n:
        x2 = x_flat.reshape(rows, lanes)
        m2 = m_flat.reshape(rows, lanes)
    else:
        # 128-aligned prefix goes through the kernel; the <=127-element tail is
        # handled with plain jnp below (no full-array pad / output-slice passes).
        x2 = x_flat[:n_main].reshape(rows, lanes)
        m2 = m_flat[:n_main].reshape(rows, lanes)

    cp_kwargs = dict(dimension_semantics=("parallel",))
    if vmem_limit is not None:
        # 4 streams x 2 pipeline buffers x tile, plus headroom.
        needed = 2 * 4 * tile_rows * lanes * itemsize + (8 << 20)
        cp_kwargs["vmem_limit_bytes"] = int(max(vmem_limit, needed))

    kernel = functools.partial(_nonleaky_kernel,
                               threshold=float(threshold),
                               reset_zero=bool(reset_zero))
    spec = pl.BlockSpec((tile_rows, lanes), lambda i: (i, 0))

    spikes2, new_mem2 = pl.pallas_call(
        kernel,
        out_shape=(jax.ShapeDtypeStruct((rows, lanes), out_spike_dtype),
                   jax.ShapeDtypeStruct((rows, lanes), dtype)),
        grid_spec=pltpu.PrefetchScalarGridSpec(
            num_scalar_prefetch=0,
            grid=grid,
            in_specs=[spec, spec],
            out_specs=[spec, spec]),
        # mem is read before new_mem is written within each tile and shares the
        # same index_map -> its HBM buffer can be reused for the output (only
        # actually realized when the caller donates mem; see `nonleaky_step`).
        input_output_aliases={1: 1},
        compiler_params=pltpu.CompilerParams(**cp_kwargs),
    )(x2, m2)

    if n_main == n:
        spikes = spikes2.reshape(orig_shape)
        new_mem = new_mem2.reshape(orig_shape)
    else:
        s_tail, m_tail = _jnp_update(x_flat[n_main:], m_flat[n_main:],
                                     threshold, reset_zero, out_spike_dtype)
        spikes = jnp.concatenate([spikes2.reshape(-1), s_tail]).reshape(orig_shape)
        new_mem = jnp.concatenate([new_mem2.reshape(-1), m_tail]).reshape(orig_shape)
    return spikes, {"mem": new_mem}


# Jitted step that donates `mem` so the mem -> new_mem buffer alias is realized
# (no defensive copy). Callers must not read the donated mem array afterwards.
nonleaky_step = jax.jit(
    nonleaky_forward,
    static_argnames=("threshold", "reset_zero", "spikes_dtype"),
    donate_argnums=(1,))


def _reference(x, mem, threshold, reset_zero):
    spikes = (mem - threshold > 0.0).astype(x.dtype)
    if reset_zero:
        new_mem = (mem + x) * (1.0 - spikes)
    else:
        new_mem = mem + x - spikes * threshold
    return spikes, new_mem


if __name__ == "__main__":
    key = jax.random.PRNGKey(0)
    kx, km = jax.random.split(key)
    B, C, H, W = 2, 4, 16, 16
    x = jax.random.normal(kx, (B, C, H, W), dtype=jnp.float32)
    mem0 = jax.random.normal(km, (B, C, H, W), dtype=jnp.float32) * 2.0
    threshold = 1.0

    ref_s1, ref_m1 = _reference(x, jnp.zeros_like(x), threshold, True)
    ref_s2, ref_m2 = _reference(x, mem0, threshold, True)
    ref_s3, ref_m3 = _reference(x, mem0, threshold, False)
    jax.block_until_ready((ref_s1, ref_m1, ref_s2, ref_m2, ref_s3, ref_m3))

    # Case 1: h is None (first step) -> closed-form fast path (no kernel).
    s1, h1 = nonleaky_forward(x, None, threshold=threshold, reset_zero=True)
    jax.block_until_ready((s1, h1["mem"]))
    assert jnp.allclose(s1, ref_s1), "spikes mismatch (case 1)"
    assert jnp.allclose(h1["mem"], ref_m1), "mem mismatch (case 1)"

    # Case 2: existing state, hard reset (Pallas kernel, no donation).
    s2, h2 = nonleaky_forward(x, mem0, threshold=threshold, reset_zero=True)
    jax.block_until_ready((s2, h2["mem"]))
    assert jnp.allclose(s2, ref_s2), "spikes mismatch (case 2)"
    assert jnp.allclose(h2["mem"], ref_m2), "mem mismatch (case 2)"

    # Case 3: soft reset via the jitted step that donates mem (realizes the
    # mem -> new_mem alias). Use a fresh copy so mem0 stays readable afterwards.
    mem3 = mem0 + 0.0
    jax.block_until_ready(mem3)
    with warnings.catch_warnings():
        warnings.simplefilter("ignore")  # donation-fallback warnings only
        s3, h3 = nonleaky_step(x, mem3, threshold=threshold, reset_zero=False)
    jax.block_until_ready((s3, h3["mem"]))
    assert jnp.allclose(s3, ref_s3), "spikes mismatch (case 3)"
    assert jnp.allclose(h3["mem"], ref_m3), "mem mismatch (case 3)"

    # Case 4: narrower spikes output stream (0/1 values are exact in bf16).
    s4, h4 = nonleaky_forward(x, mem0, threshold=threshold, reset_zero=True,
                              spikes_dtype=jnp.bfloat16)
    jax.block_until_ready((s4, h4["mem"]))
    assert s4.dtype == jnp.bfloat16
    assert jnp.allclose(s4.astype(jnp.float32), ref_s2), "spikes mismatch (case 4)"
    assert jnp.allclose(h4["mem"], ref_m2), "mem mismatch (case 4)"

    # Case 5: size not a multiple of 128 -> aligned prefix in the kernel,
    # tail handled with plain jnp (no full-array pad/slice passes).
    xt = jax.random.normal(kx, (1000,), dtype=jnp.float32)
    mt = jax.random.normal(km, (1000,), dtype=jnp.float32) * 2.0
    ref_s5, ref_m5 = _reference(xt, mt, threshold, True)
    s5, h5 = nonleaky_forward(xt, mt, threshold=threshold, reset_zero=True)
    jax.block_until_ready((s5, h5["mem"]))
    assert jnp.allclose(s5, ref_s5), "spikes mismatch (case 5)"
    assert jnp.allclose(h5["mem"], ref_m5), "mem mismatch (case 5)"

    print("KERNEL_OK")
</pallas_src>

<mosaic_0001>
module attributes {stable_mosaic.version = 11 : i64} {
  func.func @_nonleaky_kernel(%arg0: i32, %arg1: memref<8x256xf32, #tpu.memory_space<vmem>>, %arg2: memref<8x256xf32, #tpu.memory_space<vmem>>, %arg3: memref<8x256xf32, #tpu.memory_space<vmem>>, %arg4: memref<8x256xf32, #tpu.memory_space<vmem>>) attributes {dimension_semantics = [#tpu.dimension_semantics<parallel>], iteration_bounds = array<i64: 1>, scalar_prefetch = 0 : i64, scratch_operands = 0 : i64, tpu.core_type = #tpu.core_type<tc>, window_params = [{transform_indices = @transform_0, window_bounds = array<i64: 8, 256>}, {transform_indices = @transform_1, window_bounds = array<i64: 8, 256>}, {transform_indices = @transform_2, window_bounds = array<i64: 8, 256>}, {transform_indices = @transform_3, window_bounds = array<i64: 8, 256>}]} {
    %c0 = arith.constant 0 : index
    %c0_0 = arith.constant 0 : index
    %0 = vector.load %arg2[%c0, %c0_0] : memref<8x256xf32, #tpu.memory_space<vmem>>, vector<8x256xf32>
    %c0_1 = arith.constant 0 : index
    %c0_2 = arith.constant 0 : index
    %1 = vector.load %arg1[%c0_1, %c0_2] : memref<8x256xf32, #tpu.memory_space<vmem>>, vector<8x256xf32>
    %cst = arith.constant 1.000000e+00 : f32
    %2 = vector.broadcast %cst : f32 to vector<8x256xf32>
    %3 = arith.subf %0, %2 : vector<8x256xf32>
    %cst_3 = arith.constant 0.000000e+00 : f32
    %4 = vector.broadcast %cst_3 : f32 to vector<8x256xf32>
    %5 = arith.cmpf ogt, %3, %4 : vector<8x256xf32>
    %6 = arith.extui %5 : vector<8x256xi1> to vector<8x256xi32>
    %7 = arith.sitofp %6 : vector<8x256xi32> to vector<8x256xf32>
    %c0_4 = arith.constant 0 : index
    %c0_5 = arith.constant 0 : index
    %8 = vector.load %arg3[%c0_4, %c0_5] : memref<8x256xf32, #tpu.memory_space<vmem>>, vector<8x256xf32>
    tpu.vector_store %arg3[%c0_4, %c0_5], %7 {strides = array<i32>} : memref<8x256xf32, #tpu.memory_space<vmem>>, vector<8x256xf32>,
    %9 = arith.addf %0, %1 : vector<8x256xf32>
    %cst_6 = arith.constant 1.000000e+00 : f32
    %10 = vector.broadcast %cst_6 : f32 to vector<8x256xf32>
    %11 = arith.subf %10, %7 : vector<8x256xf32>
    %12 = arith.mulf %9, %11 : vector<8x256xf32>
    %c0_7 = arith.constant 0 : index
    %c0_8 = arith.constant 0 : index
    %13 = vector.load %arg4[%c0_7, %c0_8] : memref<8x256xf32, #tpu.memory_space<vmem>>, vector<8x256xf32>
    tpu.vector_store %arg4[%c0_7, %c0_8], %12 {strides = array<i32>} : memref<8x256xf32, #tpu.memory_space<vmem>>, vector<8x256xf32>,
    return
  }
  func.func @transform_0(%arg0: i32) -> (i32, i32) {
    %c0_i32 = arith.constant 0 : i32
    %c0_i32_0 = arith.constant 0 : i32
    return %arg0, %c0_i32 : i32, i32
  }
  func.func @transform_1(%arg0: i32) -> (i32, i32) {
    %c0_i32 = arith.constant 0 : i32
    %c0_i32_0 = arith.constant 0 : i32
    return %arg0, %c0_i32 : i32, i32
  }
  func.func @transform_2(%arg0: i32) -> (i32, i32) {
    %c0_i32 = arith.constant 0 : i32
    %c0_i32_0 = arith.constant 0 : i32
    return %arg0, %c0_i32 : i32, i32
  }
  func.func @transform_3(%arg0: i32) -> (i32, i32) {
    %c0_i32 = arith.constant 0 : i32
    %c0_i32_0 = arith.constant 0 : i32
    return %arg0, %c0_i32 : i32, i32
  }
}

</mosaic_0001>

<llo_original>
// kernel: tpu_custom_call.1
$region0: #{tpu_custom_call.1}
  #allocation0 [shape = 'u32[]', space=smem, size = 0x4, offset = 0x4, fixed_abs, tag = 'smem constant byte address 0x4 - core index']
  #allocation1 [shape = 'u32[72,128]{1,0:T(1,128)}', space=vmem, size = 0x9000, scoped, tag = 'internal scratch']
  %s0 = inlined_call_operand.vmem [shape: f32[8,256], index: 0, kind: input, shape index: {}]
  %s1 = inlined_call_operand.hbm [shape: f32[8,256], index: 1, kind: input, shape index: {}, may-alias: {1,3}]
  %s2 = inlined_call_operand.hbm [shape: f32[8,256], index: 2, kind: output, shape index: {0}]
  %s3 = inlined_call_operand.hbm [shape: f32[8,256], index: 3, kind: output, shape index: {1}, may-alias: {1,3}]
  %4 = xla_tuple %s2, %s3
  %s5 = sld [smem:[#allocation0]]
  $region30: #{tpu_custom_call.1} parent=0
    _
  %s7 = ssub.s32 1, %s5
  %s8 = scalar_select 0, %s7, %s5
  $region1: #{tpu_custom_call.1} parent=0
    #allocation2 [shape = 'u8[8192]{0}', space=vmem, size = 0x2000, scoped, tag = 'input window, operand 1, single buffered']
    #allocation3 [shape = 's32[1]{0}', space=sflag, size = 0x4, scoped, tag = 'scoped memory for tpu_custom_call.1']
    #allocation4 [shape = 's32[1]{0}', space=sflag, size = 0x4, scoped, tag = 'scoped memory for tpu_custom_call.1']
    #allocation5 [shape = 'u8[8192]{0}', space=vmem, size = 0x2000, scoped, tag = 'output window, operand 0, single buffered']
    #allocation6 [shape = 'u8[8192]{0}', space=vmem, size = 0x2000, scoped, tag = 'output window, operand 1, single buffered']
    #allocation7 [shape = 's32[1]{0}', space=sflag, size = 0x4, scoped, tag = 'scoped memory for tpu_custom_call.1']
    %9 = vsyncpa [#allocation3], 0
    %10 = vsyncpa [#allocation4], 0
    %11 = vsyncpa [#allocation7], 0
    // Predicated region
    $region2: #{tpu_custom_call.1} parent=1 // pred_check
      _
    $region3: #{tpu_custom_call.1} parent=1 // pred_check_branch
      %13 = sbr.rel (0) target = $region5
    $region4: #{tpu_custom_call.1} parent=1 // pred_region
      _
    $region5: #{tpu_custom_call.1} parent=1 // pred_fallthru
      _
    // Predicated region
    $region6: #{tpu_custom_call.1} parent=1 // pred_check
      _
    $region7: #{tpu_custom_call.1} parent=1 // pred_check_branch
      %15 = sbr.rel (0) target = $region9
    $region8: #{tpu_custom_call.1} parent=1 // pred_region
      %17 = vsyncadd [#allocation3], 0
      %s19 = sshll.u32 %s1, 4
      %s20 = int_to_ptr.hbm [resolvable:$true] %s19
      %s21 = sshll.u32 [#allocation2], 4
      %s22 = int_to_ptr.vmem [resolvable:$true] %s21
      %24 = dma.hbm_to_vmem [thread:$0]  %s20, 256, %s22, [#allocation3]
    $region9: #{tpu_custom_call.1} parent=1 // pred_fallthru
      _
    // Predicated region
    $region10: #{tpu_custom_call.1} parent=1 // pred_check
      _
    $region11: #{tpu_custom_call.1} parent=1 // pred_check_branch
      %26 = sbr.rel (0) target = $region13
    $region12: #{tpu_custom_call.1} parent=1 // pred_region
      %28 = dma.done [#allocation3], 256
    $region13: #{tpu_custom_call.1} parent=1 // pred_fallthru
      _
    %v29 = vld [vmem:[#allocation2] sm:$0xff]
    %v30 = vld [vmem:[#allocation2 + $0x8] sm:$0xff]
    %v31 = vld [vmem:[%s0] sm:$0xff]
    %v32 = vld [vmem:[%s0 + $0x8] sm:$0xff]
    %v33 = vsub.f32 %v29, 1.0
    %v34 = vsub.f32 %v30, 1.0
    %vm35 = vcmp.gt.f32.partialorder %v33, 0.0
    %vm36 = vcmp.gt.f32.partialorder %v34, 0.0
    %v37 = vsel %vm35, 1, 0
    %v38 = vsel %vm36, 1, 0
    %v39 = vcvt.s32.f32 %v37
    %v40 = vcvt.s32.f32 %v38
    %41 = vst [vmem:[#allocation5] sm:$0xff] %v39
    %42 = vst [vmem:[#allocation5 + $0x8] sm:$0xff] %v40
    %v43 = vadd.f32 %v29, %v31
    %v44 = vadd.f32 %v30, %v32
    %v45 = vsub.f32 1.0, %v39
    %v46 = vsub.f32 1.0, %v40
    %v47 = vmul.f32 %v43, %v45
    %v48 = vmul.f32 %v44, %v46
    %49 = vst [vmem:[#allocation6] sm:$0xff] %v47
    %50 = vst [vmem:[#allocation6 + $0x8] sm:$0xff] %v48
    // Predicated region
    $region14: #{tpu_custom_call.1} parent=1 // pred_check
      _
    $region15: #{tpu_custom_call.1} parent=1 // pred_check_branch
      %52 = sbr.rel (0) target = $region17
    $region16: #{tpu_custom_call.1} parent=1 // pred_region
      %54 = vsyncadd [#allocation4], 0
      %s56 = sshll.u32 [#allocation5], 4
      %s57 = int_to_ptr.vmem [resolvable:$true] %s56
      %s58 = sshll.u32 %s2, 4
      %s59 = int_to_ptr.hbm [resolvable:$true] %s58
      %61 = dma.vmem_to_hbm [thread:$0]  %s57, 256, %s59, [#allocation4]
    $region17: #{tpu_custom_call.1} parent=1 // pred_fallthru
      _
    // Predicated region
    $region18: #{tpu_custom_call.1} parent=1 // pred_check
      _
    $region19: #{tpu_custom_call.1} parent=1 // pred_check_branch
      %63 = sbr.rel (0) target = $region21
    $region20: #{tpu_custom_call.1} parent=1 // pred_region
      %65 = vsyncadd [#allocation7], 0
      %s67 = sshll.u32 [#allocation6], 4
      %s68 = int_to_ptr.vmem [resolvable:$true] %s67
      %s69 = sshll.u32 %s3, 4
      %s70 = int_to_ptr.hbm [resolvable:$true] %s69
      %72 = dma.vmem_to_hbm [thread:$0]  %s68, 256, %s70, [#allocation7]
    $region21: #{tpu_custom_call.1} parent=1 // pred_fallthru
      _
    // Predicated region
    $region22: #{tpu_custom_call.1} parent=1 // pred_check
      _
    $region23: #{tpu_custom_call.1} parent=1 // pred_check_branch
      %74 = sbr.rel (0) target = $region25
    $region24: #{tpu_custom_call.1} parent=1 // pred_region
      %76 = dma.done [#allocation4], 256
    $region25: #{tpu_custom_call.1} parent=1 // pred_fallthru
      _
    // Predicated region
    $region26: #{tpu_custom_call.1} parent=1 // pred_check
      _
    $region27: #{tpu_custom_call.1} parent=1 // pred_check_branch
      %78 = sbr.rel (0) target = $region29
    $region28: #{tpu_custom_call.1} parent=1 // pred_region
      %80 = dma.done [#allocation7], 256
    $region29: #{tpu_custom_call.1} parent=1 // pred_fallthru
      _
    %81 = vsyncpa [#allocation3], 1
    %82 = vsyncpa [#allocation4], 1
    %83 = vsyncpa [#allocation7], 1

</llo_original>
